<compile_context>
chip_gen: v5e
topology: v5e:2x2
jax: 0.10.0
libtpu: 0.0.40
codegen_flags: <defaults>
</compile_context>

<pallas_src>
import jax
import jax.numpy as jnp
import numpy as np
from jax.experimental import pallas as pl
from jax.experimental.pallas import tpu as pltpu

# ----------------------------- config (small, consistent with module) ---------
B = 2          # batch
L = 8          # seq_len
H = 32         # hidden_size
EXPAND = 2
INTER = EXPAND * H          # intermediate_size = 64
HEAD_DIM = 16
NHEADS = INTER // HEAD_DIM  # 4
S = 16                      # ssm state_size
G = 1                       # n_groups
K = 4                       # conv_kernel
CONV_DIM = INTER + 2 * G * S            # 96
PROJ = INTER + CONV_DIM + NHEADS        # 164  (d_mlp == 0)
EPS = 1e-5
BL = B * L


def _silu(x):
    return x * (1.0 / (1.0 + jnp.exp(-x)))


def _softplus(x):
    return jnp.where(x > 20.0, x, jnp.log(1.0 + jnp.exp(x)))


# ----------------------- host-side structural constants ------------------------
def _conv_shift_stack() -> np.ndarray:
    """(K*BL, BL): row-block k shifts each batch's rows down by (K-1-k) steps."""
    s = np.zeros((K * BL, BL), np.float32)
    for k in range(K):
        shift = K - 1 - k
        for b in range(B):
            for t in range(L):
                src = t - shift
                if src >= 0:
                    s[k * BL + b * L + t, b * L + src] = 1.0
    return s


def _block_tril() -> np.ndarray:
    """(BL, BL): block-diagonal (per batch element) lower-triangular ones (incl. diag)."""
    m = np.zeros((BL, BL), np.float32)
    for b in range(B):
        for t in range(L):
            m[b * L + t, b * L:b * L + t + 1] = 1.0
    return m


_CONV_SHIFT = _conv_shift_stack()                                           # (K*BL, BL)
_LTBD = _block_tril()                                                       # (BL, BL)
_HEAD_EXPAND = np.repeat(np.eye(NHEADS, dtype=np.float32), HEAD_DIM, axis=1)  # (NH, INTER)


# ----------------------------------- kernel -----------------------------------
def mamba2_block_kernel(x_ref, normw_ref, wg_ref, whbc_ref, wdt_ref,
                        cshift_ref, cw_ref, cb_ref, dtb_ref, alog_ref,
                        drep_ref, hexp_ref, ltbd_ref, gnw_ref, wo_ref,
                        out_ref):
    f32 = jnp.float32
    x = x_ref[...]                                            # (BL, H) fp32 residual

    # --- Mamba2RMSNorm (pre-norm) ---
    var = jnp.mean(x * x, axis=-1, keepdims=True)
    xn = x * jax.lax.rsqrt(var + EPS) * normw_ref[...]

    # --- in_proj, pre-split into lane-aligned segments (3 small MXU matmuls) ---
    gate = jnp.dot(xn, wg_ref[...], preferred_element_type=f32)      # (BL, INTER)
    hbc = jnp.dot(xn, whbc_ref[...], preferred_element_type=f32)     # (BL, CONV_DIM)
    dtr = jnp.dot(xn, wdt_ref[...], preferred_element_type=f32)      # (BL, NHEADS)

    # --- causal depthwise conv1d as one shift-matrix matmul + SiLU ---
    shifted = jnp.dot(cshift_ref[...], hbc, preferred_element_type=f32)   # (K*BL, CONV_DIM)
    acc = cb_ref[...] + shifted[0:BL, :] * cw_ref[0:1, :]
    for k in range(1, K):                                     # K=4, fully unrolled VPU work
        acc = acc + shifted[k * BL:(k + 1) * BL, :] * cw_ref[k:k + 1, :]
    acc = _silu(acc)

    xh = acc[:, :INTER]                                       # (BL, INTER)
    b_mat = acc[:, INTER:INTER + G * S]                       # (BL, S)   (n_groups = 1)
    c_mat = acc[:, INTER + G * S:]                            # (BL, S)

    # --- dt = softplus(dt_raw + dt_bias) ---
    dt = _softplus(dtr + dtb_ref[...])                        # (BL, NHEADS)

    # --- selective SSM: single-chunk SSD formulation (pure matmuls / elementwise) ---
    ltbd = ltbd_ref[...]                                      # (BL, BL) block-diag lower-tri ones
    aneg = -jnp.exp(alog_ref[...])                            # (1, NHEADS)  A = -exp(A_log)
    cum = jnp.dot(ltbd, dt * aneg, preferred_element_type=f32)      # (BL, NH) inclusive cumsum
    # exponent range is tiny here (|cum| < ~60), so the factored exp(+cum)/exp(-cum)
    # form is fp32-safe and avoids building per-head (L, L) decay matrices / transposes.
    decay_in = jnp.exp(-cum) * dt                             # applied to inputs  (BL, NH)
    decay_out = jnp.exp(cum)                                  # applied to outputs (BL, NH)
    hexp = hexp_ref[...]                                      # (NH, INTER) head->channel one-hot
    in_scale = jnp.dot(decay_in, hexp, preferred_element_type=f32)    # (BL, INTER)
    out_scale = jnp.dot(decay_out, hexp, preferred_element_type=f32)  # (BL, INTER)

    cbt = jax.lax.dot_general(c_mat, b_mat, (((1,), (1,)), ((), ())),
                              preferred_element_type=f32)     # (BL, BL): C_t . B_s
    mc = ltbd * cbt                                           # causal + same-batch mask
    y = out_scale * jnp.dot(mc, in_scale * xh, preferred_element_type=f32) \
        + drep_ref[...] * xh                                  # (BL, INTER)

    # --- MambaRMSNormGated (gate applied before the norm) ---
    gated = y * _silu(gate)
    var2 = jnp.mean(gated * gated, axis=-1, keepdims=True)
    yn = gated * jax.lax.rsqrt(var2 + EPS) * gnw_ref[...]

    # --- out_proj + residual (residual_in_fp32) ---
    out_ref[...] = x + jnp.dot(yn, wo_ref[...], preferred_element_type=f32)


# ----------------------------------- wrapper -----------------------------------
@jax.jit
def mamba2_block(x, norm_w, in_proj_w, conv_w, conv_b, dt_bias, a_log, d, gn_w, out_proj_w):
    # host-side parameter layout prep (pure re-shaping; folded by XLA outside the kernel)
    wg = in_proj_w[:, :INTER]                                    # (H, INTER)
    whbc = in_proj_w[:, INTER:INTER + CONV_DIM]                  # (H, CONV_DIM)
    wdt = in_proj_w[:, INTER + CONV_DIM:]                        # (H, NHEADS)
    d_rep = jnp.repeat(d.reshape(1, NHEADS), HEAD_DIM, axis=1)   # (1, INTER): D[c // head_dim]

    grid_spec = pltpu.PrefetchScalarGridSpec(
        num_scalar_prefetch=0,
        grid=(1,),
        in_specs=[
            pl.BlockSpec((BL, H), lambda i: (0, 0)),             # x (stacked batch*seq)
            pl.BlockSpec((1, H), lambda i: (0, 0)),              # pre-norm weight
            pl.BlockSpec((H, INTER), lambda i: (0, 0)),          # in_proj gate segment
            pl.BlockSpec((H, CONV_DIM), lambda i: (0, 0)),       # in_proj hidden/B/C segment
            pl.BlockSpec((H, NHEADS), lambda i: (0, 0)),         # in_proj dt segment
            pl.BlockSpec((K * BL, BL), lambda i: (0, 0)),        # stacked causal shift matrices
            pl.BlockSpec((K, CONV_DIM), lambda i: (0, 0)),       # depthwise conv weight
            pl.BlockSpec((1, CONV_DIM), lambda i: (0, 0)),       # conv bias
            pl.BlockSpec((1, NHEADS), lambda i: (0, 0)),         # dt_bias
            pl.BlockSpec((1, NHEADS), lambda i: (0, 0)),         # A_log
            pl.BlockSpec((1, INTER), lambda i: (0, 0)),          # D expanded per channel
            pl.BlockSpec((NHEADS, INTER), lambda i: (0, 0)),     # head -> channel one-hot
            pl.BlockSpec((BL, BL), lambda i: (0, 0)),            # block-diag lower-tri ones
            pl.BlockSpec((1, INTER), lambda i: (0, 0)),          # gated-norm weight
            pl.BlockSpec((INTER, H), lambda i: (0, 0)),          # out_proj (pre-transposed)
        ],
        out_specs=pl.BlockSpec((BL, H), lambda i: (0, 0)),
    )
    out = pl.pallas_call(
        mamba2_block_kernel,
        out_shape=jax.ShapeDtypeStruct((BL, H), jnp.float32),
        grid_spec=grid_spec,
        compiler_params=pltpu.CompilerParams(dimension_semantics=("arbitrary",)),
    )(x.reshape(BL, H), norm_w, wg, whbc, wdt,
      jnp.asarray(_CONV_SHIFT), conv_w, conv_b, dt_bias, a_log,
      d_rep, jnp.asarray(_HEAD_EXPAND), jnp.asarray(_LTBD), gn_w, out_proj_w)
    return out.reshape(B, L, H)


# ------------------------------ pure-JAX reference ------------------------------
def mamba2_block_ref(x, norm_w, in_proj_w, conv_w, conv_b, dt_bias, a_log, d, gn_w, out_proj_w):
    res = x
    var = jnp.mean(x * x, axis=-1, keepdims=True)
    xn = x * jax.lax.rsqrt(var + EPS) * norm_w
    proj = xn @ in_proj_w
    gate = proj[..., :INTER]
    hbc = proj[..., INTER:INTER + CONV_DIM]
    dtr = proj[..., INTER + CONV_DIM:]

    pad = jnp.pad(hbc, ((0, 0), (K - 1, 0), (0, 0)))
    acc = jnp.zeros((B, L, CONV_DIM), jnp.float32) + conv_b
    for k in range(K):
        acc = acc + pad[:, k:k + L, :] * conv_w[k]
    acc = _silu(acc)

    xh = acc[..., :INTER].reshape(B, L, NHEADS, HEAD_DIM)
    Bm = acc[..., INTER:INTER + G * S].reshape(B, L, G, S)
    Cm = acc[..., INTER + G * S:].reshape(B, L, G, S)
    dt = _softplus(dtr + dt_bias)                         # (B, L, NHEADS)

    A = -jnp.exp(a_log.reshape(NHEADS))
    Dv = d.reshape(NHEADS)

    def step(state, inp):
        x_t, b_t, c_t, dt_t = inp                         # (B,NH,P) (B,G,S) (B,G,S) (B,NH)
        bh = jnp.repeat(b_t, NHEADS // G, axis=1)
        ch = jnp.repeat(c_t, NHEADS // G, axis=1)
        dA = jnp.exp(dt_t * A)
        state = state * dA[:, :, None, None] + (dt_t[:, :, None] * x_t)[..., None] * bh[:, :, None, :]
        y = jnp.einsum('bhps,bhs->bhp', state, ch) + Dv[None, :, None] * x_t
        return state, y

    state0 = jnp.zeros((B, NHEADS, HEAD_DIM, S), jnp.float32)
    xs = (xh.transpose(1, 0, 2, 3), Bm.transpose(1, 0, 2, 3),
          Cm.transpose(1, 0, 2, 3), dt.transpose(1, 0, 2))
    _, ys = jax.lax.scan(step, state0, xs)
    y = ys.transpose(1, 0, 2, 3).reshape(B, L, INTER)

    gated = y * _silu(gate)
    var2 = jnp.mean(gated * gated, axis=-1, keepdims=True)
    yn = gated * jax.lax.rsqrt(var2 + EPS) * gn_w
    return res + yn @ out_proj_w


# ----------------------------------- main --------------------------------------
if __name__ == "__main__":
    key = jax.random.PRNGKey(0)
    k_x, k_wi, k_cw, k_cb, k_wo = jax.random.split(key, 5)

    x = jax.random.normal(k_x, (B, L, H), jnp.float32)

    # deterministic synthetic parameters (shapes per Mamba2Mixer.__init__)
    norm_w = jnp.ones((1, H), jnp.float32)                                   # Mamba2RMSNorm
    in_proj_w = 0.02 * jax.random.normal(k_wi, (H, PROJ), jnp.float32)       # Linear(H, PROJ), pre-transposed
    conv_w = 0.2 * jax.random.normal(k_cw, (K, CONV_DIM), jnp.float32)       # depthwise Conv1d weight (K, conv_dim)
    conv_b = 0.1 * jax.random.normal(k_cb, (1, CONV_DIM), jnp.float32)       # conv bias
    dt_bias = jnp.ones((1, NHEADS), jnp.float32)                             # torch.ones(num_heads)
    a_log = jnp.log(jnp.arange(1, NHEADS + 1, dtype=jnp.float32)).reshape(1, NHEADS)
    d_param = jnp.ones((1, NHEADS), jnp.float32)
    gn_w = jnp.ones((1, INTER), jnp.float32)                                 # MambaRMSNormGated
    out_proj_w = 0.02 * jax.random.normal(k_wo, (INTER, H), jnp.float32)     # Linear(INTER, H), pre-transposed

    args = (x, norm_w, in_proj_w, conv_w, conv_b, dt_bias, a_log, d_param, gn_w, out_proj_w)

    out = mamba2_block(*args)
    out = jax.block_until_ready(out)

    ref = mamba2_block_ref(*args)
    err = float(jnp.max(jnp.abs(out - ref)))
    assert out.shape == (B, L, H)
    assert np.isfinite(err) and err < 1e-2, f"mismatch vs reference: max abs err {err}"

    print("KERNEL_OK")
</pallas_src>

<mosaic_0001>
module attributes {stable_mosaic.version = 11 : i64} {
  func.func @mamba2_block_kernel(%arg0: i32, %arg1: memref<16x32xf32, #tpu.memory_space<vmem>>, %arg2: memref<1x32xf32, #tpu.memory_space<vmem>>, %arg3: memref<32x64xf32, #tpu.memory_space<vmem>>, %arg4: memref<32x96xf32, #tpu.memory_space<vmem>>, %arg5: memref<32x4xf32, #tpu.memory_space<vmem>>, %arg6: memref<64x16xf32, #tpu.memory_space<vmem>>, %arg7: memref<4x96xf32, #tpu.memory_space<vmem>>, %arg8: memref<1x96xf32, #tpu.memory_space<vmem>>, %arg9: memref<1x4xf32, #tpu.memory_space<vmem>>, %arg10: memref<1x4xf32, #tpu.memory_space<vmem>>, %arg11: memref<1x64xf32, #tpu.memory_space<vmem>>, %arg12: memref<4x64xf32, #tpu.memory_space<vmem>>, %arg13: memref<16x16xf32, #tpu.memory_space<vmem>>, %arg14: memref<1x64xf32, #tpu.memory_space<vmem>>, %arg15: memref<64x32xf32, #tpu.memory_space<vmem>>, %arg16: memref<16x32xf32, #tpu.memory_space<vmem>>) attributes {dimension_semantics = [#tpu.dimension_semantics<arbitrary>], iteration_bounds = array<i64: 1>, scalar_prefetch = 0 : i64, scratch_operands = 0 : i64, tpu.core_type = #tpu.core_type<tc>, window_params = [{pipeline_mode = #tpu.pipeline_mode<synchronous>, transform_indices = @transform_0, window_bounds = array<i64: 16, 32>}, {pipeline_mode = #tpu.pipeline_mode<synchronous>, transform_indices = @transform_1, window_bounds = array<i64: 1, 32>}, {pipeline_mode = #tpu.pipeline_mode<synchronous>, transform_indices = @transform_2, window_bounds = array<i64: 32, 64>}, {pipeline_mode = #tpu.pipeline_mode<synchronous>, transform_indices = @transform_3, window_bounds = array<i64: 32, 96>}, {pipeline_mode = #tpu.pipeline_mode<synchronous>, transform_indices = @transform_4, window_bounds = array<i64: 32, 4>}, {pipeline_mode = #tpu.pipeline_mode<synchronous>, transform_indices = @transform_5, window_bounds = array<i64: 64, 16>}, {pipeline_mode = #tpu.pipeline_mode<synchronous>, transform_indices = @transform_6, window_bounds = array<i64: 4, 96>}, {pipeline_mode = #tpu.pipeline_mode<synchronous>, transform_indices = @transform_7, window_bounds = array<i64: 1, 96>}, {pipeline_mode = #tpu.pipeline_mode<synchronous>, transform_indices = @transform_8, window_bounds = array<i64: 1, 4>}, {pipeline_mode = #tpu.pipeline_mode<synchronous>, transform_indices = @transform_9, window_bounds = array<i64: 1, 4>}, {pipeline_mode = #tpu.pipeline_mode<synchronous>, transform_indices = @transform_10, window_bounds = array<i64: 1, 64>}, {pipeline_mode = #tpu.pipeline_mode<synchronous>, transform_indices = @transform_11, window_bounds = array<i64: 4, 64>}, {pipeline_mode = #tpu.pipeline_mode<synchronous>, transform_indices = @transform_12, window_bounds = array<i64: 16, 16>}, {pipeline_mode = #tpu.pipeline_mode<synchronous>, transform_indices = @transform_13, window_bounds = array<i64: 1, 64>}, {pipeline_mode = #tpu.pipeline_mode<synchronous>, transform_indices = @transform_14, window_bounds = array<i64: 64, 32>}, {pipeline_mode = #tpu.pipeline_mode<synchronous>, transform_indices = @transform_15, window_bounds = array<i64: 16, 32>}]} {
    %c0 = arith.constant 0 : index
    %c0_0 = arith.constant 0 : index
    %0 = vector.load %arg1[%c0, %c0_0] : memref<16x32xf32, #tpu.memory_space<vmem>>, vector<16x32xf32>
    %1 = arith.mulf %0, %0 : vector<16x32xf32>
    %cst = arith.constant dense<0.000000e+00> : vector<16xf32>
    %2 = vector.multi_reduction <add>, %1, %cst [1] : vector<16x32xf32> to vector<16xf32>
    %3 = vector.shape_cast %2 : vector<16xf32> to vector<16x1xf32>
    %cst_1 = arith.constant 3.200000e+01 : f32
    %4 = vector.broadcast %cst_1 : f32 to vector<16x1xf32>
    %5 = arith.divf %3, %4 : vector<16x1xf32>
    %cst_2 = arith.constant 9.99999974E-6 : f32
    %6 = vector.broadcast %cst_2 : f32 to vector<16x1xf32>
    %7 = arith.addf %5, %6 : vector<16x1xf32>
    %8 = math.rsqrt %7 : vector<16x1xf32>
    %9 = vector.broadcast %8 : vector<16x1xf32> to vector<16x32xf32>
    %10 = arith.mulf %0, %9 : vector<16x32xf32>
    %c0_3 = arith.constant 0 : index
    %c0_4 = arith.constant 0 : index
    %11 = vector.load %arg2[%c0_3, %c0_4] : memref<1x32xf32, #tpu.memory_space<vmem>>, vector<1x32xf32>
    %12 = vector.broadcast %11 : vector<1x32xf32> to vector<16x32xf32>
    %13 = arith.mulf %10, %12 : vector<16x32xf32>
    %c0_5 = arith.constant 0 : index
    %c0_6 = arith.constant 0 : index
    %14 = vector.load %arg3[%c0_5, %c0_6] : memref<32x64xf32, #tpu.memory_space<vmem>>, vector<32x64xf32>
    %cst_7 = arith.constant dense<0.000000e+00> : vector<16x64xf32>
    %15 = tpu.matmul %13, %14, %cst_7 {dimension_numbers = #tpu.dot_dimension_numbers<[1], [0], [0], [1], [0, 0, 1, 1], [], []>} : vector<16x32xf32>, vector<32x64xf32>, vector<16x64xf32> -> vector<16x64xf32>
    %c0_8 = arith.constant 0 : index
    %c0_9 = arith.constant 0 : index
    %16 = vector.load %arg4[%c0_8, %c0_9] : memref<32x96xf32, #tpu.memory_space<vmem>>, vector<32x96xf32>
    %cst_10 = arith.constant dense<0.000000e+00> : vector<16x96xf32>
    %17 = tpu.matmul %13, %16, %cst_10 {dimension_numbers = #tpu.dot_dimension_numbers<[1], [0], [0], [1], [0, 0, 1, 1], [], []>} : vector<16x32xf32>, vector<32x96xf32>, vector<16x96xf32> -> vector<16x96xf32>
    %c0_11 = arith.constant 0 : index
    %c0_12 = arith.constant 0 : index
    %18 = vector.load %arg5[%c0_11, %c0_12] : memref<32x4xf32, #tpu.memory_space<vmem>>, vector<32x4xf32>
    %cst_13 = arith.constant dense<0.000000e+00> : vector<16x4xf32>
    %19 = tpu.matmul %13, %18, %cst_13 {dimension_numbers = #tpu.dot_dimension_numbers<[1], [0], [0], [1], [0, 0, 1, 1], [], []>} : vector<16x32xf32>, vector<32x4xf32>, vector<16x4xf32> -> vector<16x4xf32>
    %c0_14 = arith.constant 0 : index
    %c0_15 = arith.constant 0 : index
    %20 = vector.load %arg6[%c0_14, %c0_15] : memref<64x16xf32, #tpu.memory_space<vmem>>, vector<64x16xf32>
    %cst_16 = arith.constant dense<0.000000e+00> : vector<64x96xf32>
    %21 = tpu.matmul %20, %17, %cst_16 {dimension_numbers = #tpu.dot_dimension_numbers<[1], [0], [0], [1], [0, 0, 1, 1], [], []>} : vector<64x16xf32>, vector<16x96xf32>, vector<64x96xf32> -> vector<64x96xf32>
    %c0_17 = arith.constant 0 : index
    %c0_18 = arith.constant 0 : index
    %22 = vector.load %arg8[%c0_17, %c0_18] : memref<1x96xf32, #tpu.memory_space<vmem>>, vector<1x96xf32>
    %23 = vector.extract_strided_slice %21 {offsets = [0, 0], sizes = [16, 96], strides = [1, 1]} : vector<64x96xf32> to vector<16x96xf32>
    %c0_19 = arith.constant 0 : index
    %c0_20 = arith.constant 0 : index
    %24 = vector.load %arg7[%c0_19, %c0_20] : memref<4x96xf32, #tpu.memory_space<vmem>>, vector<1x96xf32>
    %25 = vector.broadcast %24 : vector<1x96xf32> to vector<16x96xf32>
    %26 = arith.mulf %23, %25 : vector<16x96xf32>
    %27 = vector.broadcast %22 : vector<1x96xf32> to vector<16x96xf32>
    %28 = arith.addf %27, %26 : vector<16x96xf32>
    %29 = vector.extract_strided_slice %21 {offsets = [16, 0], sizes = [16, 96], strides = [1, 1]} : vector<64x96xf32> to vector<16x96xf32>
    %c1 = arith.constant 1 : index
    %c0_21 = arith.constant 0 : index
    %30 = vector.load %arg7[%c1, %c0_21] : memref<4x96xf32, #tpu.memory_space<vmem>>, vector<1x96xf32>
    %31 = vector.broadcast %30 : vector<1x96xf32> to vector<16x96xf32>
    %32 = arith.mulf %29, %31 : vector<16x96xf32>
    %33 = arith.addf %28, %32 : vector<16x96xf32>
    %34 = vector.extract_strided_slice %21 {offsets = [32, 0], sizes = [16, 96], strides = [1, 1]} : vector<64x96xf32> to vector<16x96xf32>
    %c2 = arith.constant 2 : index
    %c0_22 = arith.constant 0 : index
    %35 = vector.load %arg7[%c2, %c0_22] : memref<4x96xf32, #tpu.memory_space<vmem>>, vector<1x96xf32>
    %36 = vector.broadcast %35 : vector<1x96xf32> to vector<16x96xf32>
    %37 = arith.mulf %34, %36 : vector<16x96xf32>
    %38 = arith.addf %33, %37 : vector<16x96xf32>
    %39 = vector.extract_strided_slice %21 {offsets = [48, 0], sizes = [16, 96], strides = [1, 1]} : vector<64x96xf32> to vector<16x96xf32>
    %c3 = arith.constant 3 : index
    %c0_23 = arith.constant 0 : index
    %40 = vector.load %arg7[%c3, %c0_23] : memref<4x96xf32, #tpu.memory_space<vmem>>, vector<1x96xf32>
    %41 = vector.broadcast %40 : vector<1x96xf32> to vector<16x96xf32>
    %42 = arith.mulf %39, %41 : vector<16x96xf32>
    %43 = arith.addf %38, %42 : vector<16x96xf32>
    %cst_24 = arith.constant 0.000000e+00 : f32
    %44 = vector.broadcast %cst_24 : f32 to vector<16x96xf32>
    %45 = arith.subf %44, %43 : vector<16x96xf32>
    %46 = math.exp %45 : vector<16x96xf32>
    %cst_25 = arith.constant 1.000000e+00 : f32
    %47 = vector.broadcast %cst_25 : f32 to vector<16x96xf32>
    %48 = arith.addf %47, %46 : vector<16x96xf32>
    %cst_26 = arith.constant 1.000000e+00 : f32
    %49 = vector.broadcast %cst_26 : f32 to vector<16x96xf32>
    %50 = arith.divf %49, %48 : vector<16x96xf32>
    %51 = arith.mulf %43, %50 : vector<16x96xf32>
    %52 = vector.extract_strided_slice %51 {offsets = [0, 0], sizes = [16, 64], strides = [1, 1]} : vector<16x96xf32> to vector<16x64xf32>
    %53 = vector.extract_strided_slice %51 {offsets = [0, 64], sizes = [16, 16], strides = [1, 1]} : vector<16x96xf32> to vector<16x16xf32>
    %54 = vector.extract_strided_slice %51 {offsets = [0, 80], sizes = [16, 16], strides = [1, 1]} : vector<16x96xf32> to vector<16x16xf32>
    %c0_27 = arith.constant 0 : index
    %c0_28 = arith.constant 0 : index
    %55 = vector.load %arg9[%c0_27, %c0_28] : memref<1x4xf32, #tpu.memory_space<vmem>>, vector<1x4xf32>
    %56 = vector.broadcast %55 : vector<1x4xf32> to vector<16x4xf32>
    %57 = arith.addf %19, %56 : vector<16x4xf32>
    %cst_29 = arith.constant 2.000000e+01 : f32
    %58 = vector.broadcast %cst_29 : f32 to vector<16x4xf32>
    %59 = arith.cmpf ogt, %57, %58 : vector<16x4xf32>
    %60 = math.exp %57 : vector<16x4xf32>
    %cst_30 = arith.constant 1.000000e+00 : f32
    %61 = vector.broadcast %cst_30 : f32 to vector<16x4xf32>
    %62 = arith.addf %61, %60 : vector<16x4xf32>
    %63 = math.log %62 : vector<16x4xf32>
    %64 = arith.select %59, %57, %63 : vector<16x4xi1>, vector<16x4xf32>
    %c0_31 = arith.constant 0 : index
    %c0_32 = arith.constant 0 : index
    %65 = vector.load %arg13[%c0_31, %c0_32] : memref<16x16xf32, #tpu.memory_space<vmem>>, vector<16x16xf32>
    %c0_33 = arith.constant 0 : index
    %c0_34 = arith.constant 0 : index
    %66 = vector.load %arg10[%c0_33, %c0_34] : memref<1x4xf32, #tpu.memory_space<vmem>>, vector<1x4xf32>
    %67 = math.exp %66 : vector<1x4xf32>
    %cst_35 = arith.constant 0.000000e+00 : f32
    %68 = vector.broadcast %cst_35 : f32 to vector<1x4xf32>
    %69 = arith.subf %68, %67 : vector<1x4xf32>
    %70 = vector.broadcast %69 : vector<1x4xf32> to vector<16x4xf32>
    %71 = arith.mulf %64, %70 : vector<16x4xf32>
    %cst_36 = arith.constant dense<0.000000e+00> : vector<16x4xf32>
    %72 = tpu.matmul %65, %71, %cst_36 {dimension_numbers = #tpu.dot_dimension_numbers<[1], [0], [0], [1], [0, 0, 1, 1], [], []>} : vector<16x16xf32>, vector<16x4xf32>, vector<16x4xf32> -> vector<16x4xf32>
    %cst_37 = arith.constant 0.000000e+00 : f32
    %73 = vector.broadcast %cst_37 : f32 to vector<16x4xf32>
    %74 = arith.subf %73, %72 : vector<16x4xf32>
    %75 = math.exp %74 : vector<16x4xf32>
    %76 = arith.mulf %75, %64 : vector<16x4xf32>
    %77 = math.exp %72 : vector<16x4xf32>
    %c0_38 = arith.constant 0 : index
    %c0_39 = arith.constant 0 : index
    %78 = vector.load %arg12[%c0_38, %c0_39] : memref<4x64xf32, #tpu.memory_space<vmem>>, vector<4x64xf32>
    %cst_40 = arith.constant dense<0.000000e+00> : vector<16x64xf32>
    %79 = tpu.matmul %76, %78, %cst_40 {dimension_numbers = #tpu.dot_dimension_numbers<[1], [0], [0], [1], [0, 0, 1, 1], [], []>} : vector<16x4xf32>, vector<4x64xf32>, vector<16x64xf32> -> vector<16x64xf32>
    %cst_41 = arith.constant dense<0.000000e+00> : vector<16x64xf32>
    %80 = tpu.matmul %77, %78, %cst_41 {dimension_numbers = #tpu.dot_dimension_numbers<[1], [0], [0], [1], [0, 0, 1, 1], [], []>} : vector<16x4xf32>, vector<4x64xf32>, vector<16x64xf32> -> vector<16x64xf32>
    %cst_42 = arith.constant dense<0.000000e+00> : vector<16x16xf32>
    %81 = tpu.matmul %54, %53, %cst_42 {dimension_numbers = #tpu.dot_dimension_numbers<[1], [1], [0], [0], [0, 0, 1, 0], [], []>} : vector<16x16xf32>, vector<16x16xf32>, vector<16x16xf32> -> vector<16x16xf32>
    %82 = arith.mulf %65, %81 : vector<16x16xf32>
    %83 = arith.mulf %79, %52 : vector<16x64xf32>
    %cst_43 = arith.constant dense<0.000000e+00> : vector<16x64xf32>
    %84 = tpu.matmul %82, %83, %cst_43 {dimension_numbers = #tpu.dot_dimension_numbers<[1], [0], [0], [1], [0, 0, 1, 1], [], []>} : vector<16x16xf32>, vector<16x64xf32>, vector<16x64xf32> -> vector<16x64xf32>
    %85 = arith.mulf %80, %84 : vector<16x64xf32>
    %c0_44 = arith.constant 0 : index
    %c0_45 = arith.constant 0 : index
    %86 = vector.load %arg11[%c0_44, %c0_45] : memref<1x64xf32, #tpu.memory_space<vmem>>, vector<1x64xf32>
    %87 = vector.broadcast %86 : vector<1x64xf32> to vector<16x64xf32>
    %88 = arith.mulf %87, %52 : vector<16x64xf32>
    %89 = arith.addf %85, %88 : vector<16x64xf32>
    %cst_46 = arith.constant 0.000000e+00 : f32
    %90 = vector.broadcast %cst_46 : f32 to vector<16x64xf32>
    %91 = arith.subf %90, %15 : vector<16x64xf32>
    %92 = math.exp %91 : vector<16x64xf32>
    %cst_47 = arith.constant 1.000000e+00 : f32
    %93 = vector.broadcast %cst_47 : f32 to vector<16x64xf32>
    %94 = arith.addf %93, %92 : vector<16x64xf32>
    %cst_48 = arith.constant 1.000000e+00 : f32
    %95 = vector.broadcast %cst_48 : f32 to vector<16x64xf32>
    %96 = arith.divf %95, %94 : vector<16x64xf32>
    %97 = arith.mulf %15, %96 : vector<16x64xf32>
    %98 = arith.mulf %89, %97 : vector<16x64xf32>
    %99 = arith.mulf %98, %98 : vector<16x64xf32>
    %cst_49 = arith.constant dense<0.000000e+00> : vector<16xf32>
    %100 = vector.multi_reduction <add>, %99, %cst_49 [1] : vector<16x64xf32> to vector<16xf32>
    %101 = vector.shape_cast %100 : vector<16xf32> to vector<16x1xf32>
    %cst_50 = arith.constant 6.400000e+01 : f32
    %102 = vector.broadcast %cst_50 : f32 to vector<16x1xf32>
    %103 = arith.divf %101, %102 : vector<16x1xf32>
    %cst_51 = arith.constant 9.99999974E-6 : f32
    %104 = vector.broadcast %cst_51 : f32 to vector<16x1xf32>
    %105 = arith.addf %103, %104 : vector<16x1xf32>
    %106 = math.rsqrt %105 : vector<16x1xf32>
    %107 = vector.broadcast %106 : vector<16x1xf32> to vector<16x64xf32>
    %108 = arith.mulf %98, %107 : vector<16x64xf32>
    %c0_52 = arith.constant 0 : index
    %c0_53 = arith.constant 0 : index
    %109 = vector.load %arg14[%c0_52, %c0_53] : memref<1x64xf32, #tpu.memory_space<vmem>>, vector<1x64xf32>
    %110 = vector.broadcast %109 : vector<1x64xf32> to vector<16x64xf32>
    %111 = arith.mulf %108, %110 : vector<16x64xf32>
    %c0_54 = arith.constant 0 : index
    %c0_55 = arith.constant 0 : index
    %112 = vector.load %arg15[%c0_54, %c0_55] : memref<64x32xf32, #tpu.memory_space<vmem>>, vector<64x32xf32>
    %cst_56 = arith.constant dense<0.000000e+00> : vector<16x32xf32>
    %113 = tpu.matmul %111, %112, %cst_56 {dimension_numbers = #tpu.dot_dimension_numbers<[1], [0], [0], [1], [0, 0, 1, 1], [], []>} : vector<16x64xf32>, vector<64x32xf32>, vector<16x32xf32> -> vector<16x32xf32>
    %114 = arith.addf %0, %113 : vector<16x32xf32>
    %c0_57 = arith.constant 0 : index
    %c0_58 = arith.constant 0 : index
    %115 = vector.load %arg16[%c0_57, %c0_58] : memref<16x32xf32, #tpu.memory_space<vmem>>, vector<16x32xf32>
    tpu.vector_store %arg16[%c0_57, %c0_58], %114 {strides = array<i32>} : memref<16x32xf32, #tpu.memory_space<vmem>>, vector<16x32xf32>,
    return
  }
  func.func @transform_0(%arg0: i32) -> (i32, i32) {
    %c0_i32 = arith.constant 0 : i32
    %c0_i32_0 = arith.constant 0 : i32
    %c0_i32_1 = arith.constant 0 : i32
    return %c0_i32, %c0_i32_0 : i32, i32
  }
  func.func @transform_1(%arg0: i32) -> (i32, i32) {
    %c0_i32 = arith.constant 0 : i32
    %c0_i32_0 = arith.constant 0 : i32
    %c0_i32_1 = arith.constant 0 : i32
    return %c0_i32, %c0_i32_0 : i32, i32
  }
  func.func @transform_2(%arg0: i32) -> (i32, i32) {
    %c0_i32 = arith.constant 0 : i32
    %c0_i32_0 = arith.constant 0 : i32
    %c0_i32_1 = arith.constant 0 : i32
    return %c0_i32, %c0_i32_0 : i32, i32
  }
  func.func @transform_3(%arg0: i32) -> (i32, i32) {
    %c0_i32 = arith.constant 0 : i32
    %c0_i32_0 = arith.constant 0 : i32
    %c0_i32_1 = arith.constant 0 : i32
    return %c0_i32, %c0_i32_0 : i32, i32
  }
  func.func @transform_4(%arg0: i32) -> (i32, i32) {
    %c0_i32 = arith.constant 0 : i32
    %c0_i32_0 = arith.constant 0 : i32
    %c0_i32_1 = arith.constant 0 : i32
    return %c0_i32, %c0_i32_0 : i32, i32
  }
  func.func @transform_5(%arg0: i32) -> (i32, i32) {
    %c0_i32 = arith.constant 0 : i32
    %c0_i32_0 = arith.constant 0 : i32
    %c0_i32_1 = arith.constant 0 : i32
    return %c0_i32, %c0_i32_0 : i32, i32
  }
  func.func @transform_6(%arg0: i32) -> (i32, i32) {
    %c0_i32 = arith.constant 0 : i32
    %c0_i32_0 = arith.constant 0 : i32
    %c0_i32_1 = arith.constant 0 : i32
    return %c0_i32, %c0_i32_0 : i32, i32
  }
  func.func @transform_7(%arg0: i32) -> (i32, i32) {
    %c0_i32 = arith.constant 0 : i32
    %c0_i32_0 = arith.constant 0 : i32
    %c0_i32_1 = arith.constant 0 : i32
    return %c0_i32, %c0_i32_0 : i32, i32
  }
  func.func @transform_8(%arg0: i32) -> (i32, i32) {
    %c0_i32 = arith.constant 0 : i32
    %c0_i32_0 = arith.constant 0 : i32
    %c0_i32_1 = arith.constant 0 : i32
    return %c0_i32, %c0_i32_0 : i32, i32
  }
  func.func @transform_9(%arg0: i32) -> (i32, i32) {
    %c0_i32 = arith.constant 0 : i32
    %c0_i32_0 = arith.constant 0 : i32
    %c0_i32_1 = arith.constant 0 : i32
    return %c0_i32, %c0_i32_0 : i32, i32
  }
  func.func @transform_10(%arg0: i32) -> (i32, i32) {
    %c0_i32 = arith.constant 0 : i32
    %c0_i32_0 = arith.constant 0 : i32
    %c0_i32_1 = arith.constant 0 : i32
    return %c0_i32, %c0_i32_0 : i32, i32
  }
  func.func @transform_11(%arg0: i32) -> (i32, i32) {
    %c0_i32 = arith.constant 0 : i32
    %c0_i32_0 = arith.constant 0 : i32
    %c0_i32_1 = arith.constant 0 : i32
    return %c0_i32, %c0_i32_0 : i32, i32
  }
  func.func @transform_12(%arg0: i32) -> (i32, i32) {
    %c0_i32 = arith.constant 0 : i32
    %c0_i32_0 = arith.constant 0 : i32
    %c0_i32_1 = arith.constant 0 : i32
    return %c0_i32, %c0_i32_0 : i32, i32
  }
  func.func @transform_13(%arg0: i32) -> (i32, i32) {
    %c0_i32 = arith.constant 0 : i32
    %c0_i32_0 = arith.constant 0 : i32
    %c0_i32_1 = arith.constant 0 : i32
    return %c0_i32, %c0_i32_0 : i32, i32
  }
  func.func @transform_14(%arg0: i32) -> (i32, i32) {
    %c0_i32 = arith.constant 0 : i32
    %c0_i32_0 = arith.constant 0 : i32
    %c0_i32_1 = arith.constant 0 : i32
    return %c0_i32, %c0_i32_0 : i32, i32
  }
  func.func @transform_15(%arg0: i32) -> (i32, i32) {
    %c0_i32 = arith.constant 0 : i32
    %c0_i32_0 = arith.constant 0 : i32
    %c0_i32_1 = arith.constant 0 : i32
    return %c0_i32, %c0_i32_0 : i32, i32
  }
}

</mosaic_0001>

<llo_original>
// kernel: mamba2_block.1
$region0: #{mamba2_block.1}
  #allocation0 [shape = 'u32[]', space=smem, size = 0x4, offset = 0x4, fixed_abs, tag = 'smem constant byte address 0x4 - core index']
  #allocation1 [shape = 'u32[72,128]{1,0:T(1,128)}', space=vmem, size = 0x9000, scoped, tag = 'internal scratch']
  %s0 = inlined_call_operand.vmem [shape: f32[16,32], index: 0, kind: input, shape index: {}]
  %s1 = inlined_call_operand.vmem [shape: f32[1,32], index: 1, kind: input, shape index: {}]
  %s2 = inlined_call_operand.vmem [shape: f32[32,64], index: 2, kind: input, shape index: {}]
  %s3 = inlined_call_operand.vmem [shape: f32[32,96], index: 3, kind: input, shape index: {}]
  %s4 = inlined_call_operand.vmem [shape: f32[32,4], index: 4, kind: input, shape index: {}]
  %s5 = inlined_call_operand.vmem [shape: f32[64,16], index: 5, kind: input, shape index: {}]
  %s6 = inlined_call_operand.vmem [shape: f32[4,96], index: 6, kind: input, shape index: {}]
  %s7 = inlined_call_operand.vmem [shape: f32[1,96], index: 7, kind: input, shape index: {}]
  %s8 = inlined_call_operand.vmem [shape: f32[1,4], index: 8, kind: input, shape index: {}]
  %s9 = inlined_call_operand.vmem [shape: f32[1,4], index: 9, kind: input, shape index: {}]
  %s10 = inlined_call_operand.vmem [shape: f32[1,64], index: 10, kind: input, shape index: {}]
  %s11 = inlined_call_operand.vmem [shape: f32[4,64], index: 11, kind: input, shape index: {}]
  %s12 = inlined_call_operand.vmem [shape: f32[16,16], index: 12, kind: input, shape index: {}]
  %s13 = inlined_call_operand.vmem [shape: f32[1,64], index: 13, kind: input, shape index: {}]
  %s14 = inlined_call_operand.vmem [shape: f32[64,32], index: 14, kind: input, shape index: {}]
  %s15 = inlined_call_operand.hbm [shape: f32[16,32], index: 15, kind: output, shape index: {}]
  %s16 = sld [smem:[#allocation0]]
  $region70: #{mamba2_block.1} parent=0
    _
  %s18 = ssub.s32 1, %s16
  %s19 = scalar_select 0, %s18, %s16
  $region1: #{mamba2_block.1} parent=0
    #allocation2 [shape = 'u8[8192]{0}', space=vmem, size = 0x2000, scoped, tag = 'output window, operand 0, single buffered']
    #allocation3 [shape = 's32[1]{0}', space=sflag, size = 0x4, scoped, tag = 'scoped memory for mamba2_block.1']
    %20 = vsyncpa [#allocation3], 0
    // Predicated region
    $region2: #{mamba2_block.1} parent=1 // pred_check
      _
    $region3: #{mamba2_block.1} parent=1 // pred_check_branch
      %22 = sbr.rel (0) target = $region5
    $region4: #{mamba2_block.1} parent=1 // pred_region
      _
    $region5: #{mamba2_block.1} parent=1 // pred_fallthru
      _
    // Predicated region
    $region6: #{mamba2_block.1} parent=1 // pred_check
      _
    $region7: #{mamba2_block.1} parent=1 // pred_check_branch
      %24 = sbr.rel (0) target = $region9
    $region8: #{mamba2_block.1} parent=1 // pred_region
      _
    $region9: #{mamba2_block.1} parent=1 // pred_fallthru
      _
    // Predicated region
    $region10: #{mamba2_block.1} parent=1 // pred_check
      _
    $region11: #{mamba2_block.1} parent=1 // pred_check_branch
      %26 = sbr.rel (0) target = $region13
    $region12: #{mamba2_block.1} parent=1 // pred_region
      _
    $region13: #{mamba2_block.1} parent=1 // pred_fallthru
      _
    // Predicated region
    $region14: #{mamba2_block.1} parent=1 // pred_check
      _
    $region15: #{mamba2_block.1} parent=1 // pred_check_branch
      %28 = sbr.rel (0) target = $region17
    $region16: #{mamba2_block.1} parent=1 // pred_region
      _
    $region17: #{mamba2_block.1} parent=1 // pred_fallthru
      _
    // Predicated region
    $region18: #{mamba2_block.1} parent=1 // pred_check
      _
    $region19: #{mamba2_block.1} parent=1 // pred_check_branch
      %30 = sbr.rel (0) target = $region21
    $region20: #{mamba2_block.1} parent=1 // pred_region
      _
    $region21: #{mamba2_block.1} parent=1 // pred_fallthru
      _
    // Predicated region
    $region22: #{mamba2_block.1} parent=1 // pred_check
      _
    $region23: #{mamba2_block.1} parent=1 // pred_check_branch
      %32 = sbr.rel (0) target = $region25
    $region24: #{mamba2_block.1} parent=1 // pred_region
      _
    $region25: #{mamba2_block.1} parent=1 // pred_fallthru
      _
    // Predicated region
    $region26: #{mamba2_block.1} parent=1 // pred_check
      _
    $region27: #{mamba2_block.1} parent=1 // pred_check_branch
      %34 = sbr.rel (0) target = $region29
    $region28: #{mamba2_block.1} parent=1 // pred_region
      _
    $region29: #{mamba2_block.1} parent=1 // pred_fallthru
      _
    // Predicated region
    $region30: #{mamba2_block.1} parent=1 // pred_check
      _
    $region31: #{mamba2_block.1} parent=1 // pred_check_branch
      %36 = sbr.rel (0) target = $region33
    $region32: #{mamba2_block.1} parent=1 // pred_region
      _
    $region33: #{mamba2_block.1} parent=1 // pred_fallthru
      _
    // Predicated region
    $region34: #{mamba2_block.1} parent=1 // pred_check
      _
    $region35: #{mamba2_block.1} parent=1 // pred_check_branch
      %38 = sbr.rel (0) target = $region37
    $region36: #{mamba2_block.1} parent=1 // pred_region
      _
    $region37: #{mamba2_block.1} parent=1 // pred_fallthru
      _
    // Predicated region
    $region38: #{mamba2_block.1} parent=1 // pred_check
      _
    $region39: #{mamba2_block.1} parent=1 // pred_check_branch
      %40 = sbr.rel (0) target = $region41
    $region40: #{mamba2_block.1} parent=1 // pred_region
      _
    $region41: #{mamba2_block.1} parent=1 // pred_fallthru
      _
    // Predicated region
    $region42: #{mamba2_block.1} parent=1 // pred_check
      _
    $region43: #{mamba2_block.1} parent=1 // pred_check_branch
      %42 = sbr.rel (0) target = $region45
    $region44: #{mamba2_block.1} parent=1 // pred_region
      _
    $region45: #{mamba2_block.1} parent=1 // pred_fallthru
      _
    // Predicated region
    $region46: #{mamba2_block.1} parent=1 // pred_check
      _
    $region47: #{mamba2_block.1} parent=1 // pred_check_branch
      %44 = sbr.rel (0) target = $region49
    $region48: #{mamba2_block.1} parent=1 // pred_region
      _
    $region49: #{mamba2_block.1} parent=1 // pred_fallthru
      _
    // Predicated region
    $region50: #{mamba2_block.1} parent=1 // pred_check
      _
    $region51: #{mamba2_block.1} parent=1 // pred_check_branch
      %46 = sbr.rel (0) target = $region53
    $region52: #{mamba2_block.1} parent=1 // pred_region
      _
    $region53: #{mamba2_block.1} parent=1 // pred_fallthru
      _
    // Predicated region
    $region54: #{mamba2_block.1} parent=1 // pred_check
      _
    $region55: #{mamba2_block.1} parent=1 // pred_check_branch
      %48 = sbr.rel (0) target = $region57
    $region56: #{mamba2_block.1} parent=1 // pred_region
      _
    $region57: #{mamba2_block.1} parent=1 // pred_fallthru
      _
    // Predicated region
    $region58: #{mamba2_block.1} parent=1 // pred_check
      _
    $region59: #{mamba2_block.1} parent=1 // pred_check_branch
      %50 = sbr.rel (0) target = $region61
    $region60: #{mamba2_block.1} parent=1 // pred_region
      _
    $region61: #{mamba2_block.1} parent=1 // pred_fallthru
      _
    %v51 = vld [vmem:[%s0] sm:$0xff]
    %v52 = vld [vmem:[%s0 + $0x8] sm:$0xff]
    %v53 = vmul.f32 %v51, %v51
    %v54 = vmul.f32 %v52, %v52
    %vm55 = vcmask 261120
    %v56 = vsel %vm55, %v53, 0.0
    %57 = vadd.xlane.f32.xlu0 %v56
    %v58 = vpop.xlane.xlu0 %57
    %v59 = vsel %vm55, %v54, 0.0
    %60 = vadd.xlane.f32.xlu0 %v59
    %v61 = vpop.xlane.xlu0 %60
    %v62 = vrcp.pop 32.0
    %v63 = vmul.f32 32.0, %v62
    %v64 = vsub.f32 1.0, %v63
    %v65 = vmul.f32 %v62, %v64
    %v66 = vadd.f32 %v62, %v65
    %vm67 = vweird.f32 %v62
    %v68 = vsel %vm67, %v62, %v66
    %v69 = vmul.f32 %v58, %v68
    %v70 = vmul.f32 %v61, %v68
    %v71 = vadd.f32 %v69, 1e-05
    %v72 = vadd.f32 %v70, 1e-05
    %v73 = vrsqrt.pop %v71
    %v74 = vmul.f32 %v73, %v71
    %v75 = vmul.f32 %v74, %v73
    %v76 = vmul.f32 0.5, %v75
    %v77 = vsub.f32 1.5, %v76
    %v78 = vmul.f32 %v73, %v77
    %vm79 = vweird.f32 %v71
    %vm80 = vweird.f32 %v73
    %vm81 = vmor %vm79, %vm80
    %v82 = vsel %vm81, %v73, %v78
    %v83 = vrsqrt.pop %v72
    %v84 = vmul.f32 %v83, %v72
    %v85 = vmul.f32 %v84, %v83
    %v86 = vmul.f32 0.5, %v85
    %v87 = vsub.f32 1.5, %v86
    %v88 = vmul.f32 %v83, %v87
    %vm89 = vweird.f32 %v72
    %vm90 = vweird.f32 %v83
    %vm91 = vmor %vm89, %vm90
    %v92 = vsel %vm91, %v83, %v88
    %v93 = vmul.f32 %v51, %v82
    %v94 = vmul.f32 %v52, %v92
    %v95 = vld [vmem:[%s1] sm:$0x1]
    %v97 = vperm.slane %v95, 0
    %v99 = vmul.f32 %v93, %v97
    %v100 = vmul.f32 %v94, %v97
    %v101 = vld [vmem:[%s2] sm:$0xff]
    %v102 = vld [vmem:[%s2 + $0x8] sm:$0xff]
    %v103 = vld [vmem:[%s2 + $0x10] sm:$0xff]
    %v104 = vld [vmem:[%s2 + $0x18] sm:$0xff]
    %v106 = vsel %vm55, %v99, 0
    %v109 = vsel %vm55, %v100, 0
    %111 = vmatpush.msra.mxu0 0.0
    %112 = vmatpush.msra.mxu0 0.0
    %113 = vmatpush.msra.mxu0 0.0
    %114 = vmatpush.msra.mxu0 0.0
    %115 = vmatpush.msra.mxu0 0.0
    %116 = vmatpush.msra.mxu0 0.0
    %117 = vmatpush.msra.mxu0 0.0
    %118 = vmatpush.msra.mxu0 0.0
    %119 = vmatpush.msra.mxu0 0.0
    %120 = vmatpush.msra.mxu0 0.0
    %121 = vmatpush.msra.mxu0 0.0
    %122 = vmatpush.msra.mxu0 0.0
    %123 = vmatpush.msra.mxu0 %v104
    %124 = vmatpush.msra.mxu0 %v103
    %125 = vmatpush.msra.mxu0 %v102
    %126 = vmatpush.msra.mxu0 %v101
    %127 = vmatmul.f32.gmra.mxu0 %v106
    %v128 = vpop.f32.mrf.mxu0
    %v129 = vadd.f32 0.0, %v128
    %130 = vmatmul.f32.gmra.mxu0 %v109
    %v131 = vpop.f32.mrf.mxu0
    %v132 = vadd.f32 0.0, %v131
    %133 = vdwg.mxu0
    %v134 = vld [vmem:[%s3] sm:$0xff]
    %v135 = vld [vmem:[%s3 + $0x8] sm:$0xff]
    %v136 = vld [vmem:[%s3 + $0x10] sm:$0xff]
    %v137 = vld [vmem:[%s3 + $0x18] sm:$0xff]
    %138 = vmatpush.msra.mxu0 0.0
    %139 = vmatpush.msra.mxu0 0.0
    %140 = vmatpush.msra.mxu0 0.0
    %141 = vmatpush.msra.mxu0 0.0
    %142 = vmatpush.msra.mxu0 0.0
    %143 = vmatpush.msra.mxu0 0.0
    %144 = vmatpush.msra.mxu0 0.0
    %145 = vmatpush.msra.mxu0 0.0
    %146 = vmatpush.msra.mxu0 0.0
    %147 = vmatpush.msra.mxu0 0.0
    %148 = vmatpush.msra.mxu0 0.0
    %149 = vmatpush.msra.mxu0 0.0
    %150 = vmatpush.msra.mxu0 %v137
    %151 = vmatpush.msra.mxu0 %v136
    %152 = vmatpush.msra.mxu0 %v135
    %153 = vmatpush.msra.mxu0 %v134
    %154 = vmatmul.f32.gmra.mxu0 %v106
    %v155 = vpop.f32.mrf.mxu0
    %v156 = vadd.f32 0.0, %v155
    %157 = vmatmul.f32.gmra.mxu0 %v109
    %v158 = vpop.f32.mrf.mxu0
    %v159 = vadd.f32 0.0, %v158
    %160 = vdwg.mxu0
    %v161 = vld [vmem:[%s4] sm:$0xff]
    %v162 = vld [vmem:[%s4 + $0x8] sm:$0xff]
    %v163 = vld [vmem:[%s4 + $0x10] sm:$0xff]
    %v164 = vld [vmem:[%s4 + $0x18] sm:$0xff]
    %v165 = vld [vmem:[%s5] sm:$0xff]
    %v166 = vld [vmem:[%s5 + $0x8] sm:$0xff]
    %v167 = vld [vmem:[%s5 + $0x10] sm:$0xff]
    %v168 = vld [vmem:[%s5 + $0x18] sm:$0xff]
    %v169 = vld [vmem:[%s5 + $0x20] sm:$0xff]
    %v170 = vld [vmem:[%s5 + $0x28] sm:$0xff]
    %v171 = vld [vmem:[%s5 + $0x30] sm:$0xff]
    %v172 = vld [vmem:[%s5 + $0x38] sm:$0xff]
    %vm173 = vcmask 130048
    %v175 = vsel %vm173, %v165, 0
    %v178 = vsel %vm173, %v166, 0
    %v181 = vsel %vm173, %v167, 0
    %v184 = vsel %vm173, %v168, 0
    %v187 = vsel %vm173, %v169, 0
    %v190 = vsel %vm173, %v170, 0
    %v193 = vsel %vm173, %v171, 0
    %v196 = vsel %vm173, %v172, 0
    %198 = vmatpush.msra.mxu0 0.0
    %199 = vmatpush.msra.mxu0 0.0
    %200 = vmatpush.msra.mxu0 0.0
    %201 = vmatpush.msra.mxu0 0.0
    %202 = vmatpush.msra.mxu0 0.0
    %203 = vmatpush.msra.mxu0 0.0
    %204 = vmatpush.msra.mxu0 0.0
    %205 = vmatpush.msra.mxu0 0.0
    %206 = vmatpush.msra.mxu0 0.0
    %207 = vmatpush.msra.mxu0 0.0
    %208 = vmatpush.msra.mxu0 0.0
    %209 = vmatpush.msra.mxu0 0.0
    %210 = vmatpush.msra.mxu0 0.0
    %211 = vmatpush.msra.mxu0 0.0
    %212 = vmatpush.msra.mxu0 %v159
    %213 = vmatpush.msra.mxu0 %v156
    %214 = vmatmul.f32.gmra.mxu0 %v175
    %v215 = vpop.f32.mrf.mxu0
    %v216 = vadd.f32 0.0, %v215
    %217 = vmatmul.f32.gmra.mxu0 %v178
    %v218 = vpop.f32.mrf.mxu0
    %v219 = vadd.f32 0.0, %v218
    %220 = vmatmul.f32.gmra.mxu0 %v181
    %v221 = vpop.f32.mrf.mxu0
    %v222 = vadd.f32 0.0, %v221
    %223 = vmatmul.f32.gmra.mxu0 %v184
    %v224 = vpop.f32.mrf.mxu0
    %v225 = vadd.f32 0.0, %v224
    %226 = vmatmul.f32.gmra.mxu0 %v187
    %v227 = vpop.f32.mrf.mxu0
    %v228 = vadd.f32 0.0, %v227
    %229 = vmatmul.f32.gmra.mxu0 %v190
    %v230 = vpop.f32.mrf.mxu0
    %v231 = vadd.f32 0.0, %v230
    %232 = vmatmul.f32.gmra.mxu0 %v193
    %v233 = vpop.f32.mrf.mxu0
    %v234 = vadd.f32 0.0, %v233
    %235 = vmatmul.f32.gmra.mxu0 %v196
    %v236 = vpop.f32.mrf.mxu0
    %v237 = vadd.f32 0.0, %v236
    %238 = vdwg.mxu0
    %v239 = vld [vmem:[%s7] sm:$0x1]
    %v240 = vld [vmem:[%s6] sm:$0x1]
    %v241 = vperm.slane %v240, 0
    %v242 = vmul.f32 %v216, %v241
    %v243 = vmul.f32 %v219, %v241
    %v245 = vperm.slane %v239, 0
    %v247 = vadd.f32 %v245, %v242
    %v248 = vadd.f32 %v245, %v243
    %v249 = vld [vmem:[%s6 + $0x1] sm:$0x1]
    %v250 = vperm.slane %v249, 0
    %v251 = vmul.f32 %v222, %v250
    %v252 = vmul.f32 %v225, %v250
    %v253 = vadd.f32 %v247, %v251
    %v254 = vadd.f32 %v248, %v252
    %v255 = vld [vmem:[%s6 + $0x2] sm:$0x1]
    %v256 = vperm.slane %v255, 0
    %v257 = vmul.f32 %v228, %v256
    %v258 = vmul.f32 %v231, %v256
    %v259 = vadd.f32 %v253, %v257
    %v260 = vadd.f32 %v254, %v258
    %v261 = vld [vmem:[%s6 + $0x3] sm:$0x1]
    %v262 = vperm.slane %v261, 0
    %v263 = vmul.f32 %v234, %v262
    %v264 = vmul.f32 %v237, %v262
    %v265 = vadd.f32 %v259, %v263
    %v266 = vadd.f32 %v260, %v264
    %v267 = vsub.f32 0.0, %v265
    %v268 = vsub.f32 0.0, %v266
    %v269 = vmul.f32 %v267, 1.442695
    %v270 = vpow.pop %v269
    %v271 = vmul.f32 %v268, 1.442695
    %v272 = vpow.pop %v271
    %v273 = vadd.f32 %v270, 1.0
    %v274 = vadd.f32 %v272, 1.0
    %v275 = vrcp.pop %v273
    %v276 = vmul.f32 %v273, %v275
    %v277 = vsub.f32 1.0, %v276
    %v278 = vmul.f32 %v275, %v277
    %v279 = vadd.f32 %v275, %v278
    %vm280 = vweird.f32 %v273
    %vm281 = vweird.f32 %v275
    %vm282 = vmor %vm280, %vm281
    %v283 = vsel %vm282, %v275, %v279
    %v284 = vand.u32 2147483647, %v273
    %vm285 = vcmp.eq.f32.partialorder %v284, 8.507059e+37
    %v286 = vand.u32 %v273, 2147483648
    %v287 = vor.u32 1.1754944e-38, %v286
    %v288 = vsel %vm285, %v287, %v283
    %v289 = vmul.f32 1.0, %v288
    %v290 = vrcp.pop %v274
    %v291 = vmul.f32 %v274, %v290
    %v292 = vsub.f32 1.0, %v291
    %v293 = vmul.f32 %v290, %v292
    %v294 = vadd.f32 %v290, %v293
    %vm295 = vweird.f32 %v274
    %vm296 = vweird.f32 %v290
    %vm297 = vmor %vm295, %vm296
    %v298 = vsel %vm297, %v290, %v294
    %v299 = vand.u32 2147483647, %v274
    %vm300 = vcmp.eq.f32.partialorder %v299, 8.507059e+37
    %v301 = vand.u32 %v274, 2147483648
    %v302 = vor.u32 1.1754944e-38, %v301
    %v303 = vsel %vm300, %v302, %v298
    %v304 = vmul.f32 1.0, %v303
    %v305 = vmul.f32 %v265, %v289
    %v306 = vmul.f32 %v266, %v304
    %v307 = vld [vmem:[%s8] sm:$0x1]
    %v309 = vperm.slane %v307, 0
    %311 = vmatpush.msra.mxu0 0.0
    %312 = vmatpush.msra.mxu0 0.0
    %313 = vmatpush.msra.mxu0 0.0
    %314 = vmatpush.msra.mxu0 0.0
    %315 = vmatpush.msra.mxu0 0.0
    %316 = vmatpush.msra.mxu0 0.0
    %317 = vmatpush.msra.mxu0 0.0
    %318 = vmatpush.msra.mxu0 0.0
    %319 = vmatpush.msra.mxu0 0.0
    %320 = vmatpush.msra.mxu0 0.0
    %321 = vmatpush.msra.mxu0 0.0
    %322 = vmatpush.msra.mxu0 0.0
    %323 = vmatpush.msra.mxu0 %v164
    %324 = vmatpush.msra.mxu0 %v163
    %325 = vmatpush.msra.mxu0 %v162
    %326 = vmatpush.msra.mxu0 %v161
    %327 = vmatmul.f32.gmra.mxu0 %v106
    %v328 = vpop.f32.mrf.mxu0
    %v329 = vadd.f32 %v309, %v328
    %330 = vmatmul.f32.gmra.mxu0 %v109
    %v331 = vpop.f32.mrf.mxu0
    %v332 = vadd.f32 %v309, %v331
    %333 = vdwg.mxu0
    %vm334 = vcmp.gt.f32.partialorder %v329, 20.0
    %vm335 = vcmp.gt.f32.partialorder %v332, 20.0
    %v336 = vmul.f32 %v329, 1.442695
    %v337 = vpow.pop %v336
    %v338 = vmul.f32 %v332, 1.442695
    %v339 = vpow.pop %v338
    %v340 = vadd.f32 %v337, 1.0
    %v341 = vadd.f32 %v339, 1.0
    %v342 = vlog2.pop %v340
    %v343 = vmul.f32 %v342, 0.6931472
    %v344 = vlog2.pop %v341
    %v345 = vmul.f32 %v344, 0.6931472
    %v346 = vsel %vm334, %v329, %v343
    %v347 = vsel %vm335, %v332, %v345
    %v348 = vld [vmem:[%s12] sm:$0xff]
    %v349 = vld [vmem:[%s12 + $0x8] sm:$0xff]
    %v350 = vld [vmem:[%s9] sm:$0x1]
    %v351 = vmul.f32 %v350, 1.442695
    %v352 = vpow.pop %v351
    %v353 = vsub.f32 0.0, %v352
    %v355 = vperm.slane %v353, 0
    %v357 = vmul.f32 %v346, %v355
    %v358 = vmul.f32 %v347, %v355
    %v360 = vsel %vm173, %v348, 0
    %v363 = vsel %vm173, %v349, 0
    %365 = vmatpush.msra.mxu0 0.0
    %366 = vmatpush.msra.mxu0 0.0
    %367 = vmatpush.msra.mxu0 0.0
    %368 = vmatpush.msra.mxu0 0.0
    %369 = vmatpush.msra.mxu0 0.0
    %370 = vmatpush.msra.mxu0 0.0
    %371 = vmatpush.msra.mxu0 0.0
    %372 = vmatpush.msra.mxu0 0.0
    %373 = vmatpush.msra.mxu0 0.0
    %374 = vmatpush.msra.mxu0 0.0
    %375 = vmatpush.msra.mxu0 0.0
    %376 = vmatpush.msra.mxu0 0.0
    %377 = vmatpush.msra.mxu0 0.0
    %378 = vmatpush.msra.mxu0 0.0
    %379 = vmatpush.msra.mxu0 %v358
    %380 = vmatpush.msra.mxu0 %v357
    %381 = vmatmul.f32.gmra.mxu0 %v360
    %v382 = vpop.f32.mrf.mxu0
    %v383 = vadd.f32 0.0, %v382
    %384 = vmatmul.f32.gmra.mxu0 %v363
    %v385 = vpop.f32.mrf.mxu0
    %v386 = vadd.f32 0.0, %v385
    %387 = vdwg.mxu0
    %v388 = vsub.f32 0.0, %v383
    %v389 = vsub.f32 0.0, %v386
    %v390 = vmul.f32 %v388, 1.442695
    %v391 = vpow.pop %v390
    %v392 = vmul.f32 %v389, 1.442695
    %v393 = vpow.pop %v392
    %v394 = vmul.f32 %v391, %v346
    %v395 = vmul.f32 %v393, %v347
    %v396 = vmul.f32 %v383, 1.442695
    %v397 = vpow.pop %v396
    %v398 = vmul.f32 %v386, 1.442695
    %v399 = vpow.pop %v398
    %v400 = vld [vmem:[%s11] sm:$0xf]
    %vm401 = vcmask 31744
    %v403 = vsel %vm401, %v394, 0
    %v406 = vsel %vm401, %v395, 0
    %vm408 = vcmask 1043456
    %v410 = vsel %vm408, %v400, 0
    %412 = vmatpush.msra.mxu0 0.0
    %413 = vmatpush.msra.mxu0 0.0
    %414 = vmatpush.msra.mxu0 0.0
    %415 = vmatpush.msra.mxu0 0.0
    %416 = vmatpush.msra.mxu0 0.0
    %417 = vmatpush.msra.mxu0 0.0
    %418 = vmatpush.msra.mxu0 0.0
    %419 = vmatpush.msra.mxu0 0.0
    %420 = vmatpush.msra.mxu0 0.0
    %421 = vmatpush.msra.mxu0 0.0
    %422 = vmatpush.msra.mxu0 0.0
    %423 = vmatpush.msra.mxu0 0.0
    %424 = vmatpush.msra.mxu0 0.0
    %425 = vmatpush.msra.mxu0 0.0
    %426 = vmatpush.msra.mxu0 0.0
    %427 = vmatpush.msra.mxu0 %v410
    %428 = vmatmul.f32.gmra.mxu0 %v403
    %v429 = vpop.f32.mrf.mxu0
    %v430 = vadd.f32 0.0, %v429
    %431 = vmatmul.f32.gmra.mxu0 %v406
    %v432 = vpop.f32.mrf.mxu0
    %v433 = vadd.f32 0.0, %v432
    %434 = vdwg.mxu0
    %v436 = vsel %vm401, %v397, 0
    %v439 = vsel %vm401, %v399, 0
    %441 = vmatpush.msra.mxu0 0.0
    %442 = vmatpush.msra.mxu0 0.0
    %443 = vmatpush.msra.mxu0 0.0
    %444 = vmatpush.msra.mxu0 0.0
    %445 = vmatpush.msra.mxu0 0.0
    %446 = vmatpush.msra.mxu0 0.0
    %447 = vmatpush.msra.mxu0 0.0
    %448 = vmatpush.msra.mxu0 0.0
    %449 = vmatpush.msra.mxu0 0.0
    %450 = vmatpush.msra.mxu0 0.0
    %451 = vmatpush.msra.mxu0 0.0
    %452 = vmatpush.msra.mxu0 0.0
    %453 = vmatpush.msra.mxu0 0.0
    %454 = vmatpush.msra.mxu0 0.0
    %455 = vmatpush.msra.mxu0 0.0
    %456 = vmatpush.msra.mxu0 %v410
    %457 = vmatmul.f32.gmra.mxu0 %v436
    %v458 = vpop.f32.mrf.mxu0
    %v459 = vadd.f32 0.0, %v458
    %460 = vmatmul.f32.gmra.mxu0 %v439
    %v461 = vpop.f32.mrf.mxu0
    %v462 = vadd.f32 0.0, %v461
    %463 = vdwg.mxu0
    %466 = vrot.lane.b32.xlu0 %v305, 48
    %v467 = vpop.permute.xlu0 %466
    %468 = vrot.lane.b32.xlu0 %v306, 48
    %v469 = vpop.permute.xlu0 %468
    %470 = vrot.lane.b32.xlu0 %v305, 64
    %v471 = vpop.permute.xlu0 %470
    %472 = vrot.lane.b32.xlu0 %v306, 64
    %v473 = vpop.permute.xlu0 %472
    %v474 = vsel %vm173, %v467, 0
    %v476 = vsel %vm173, %v469, 0
    %v478 = vsel %vm173, %v471, 0
    %v480 = vsel %vm173, %v473, 0
    %482 = vmatpush.xpose.msra.mxu0 0.0
    %483 = vmatpush.xpose.msra.mxu0 0.0
    %484 = vmatpush.xpose.msra.mxu0 0.0
    %485 = vmatpush.xpose.msra.mxu0 0.0
    %486 = vmatpush.xpose.msra.mxu0 0.0
    %487 = vmatpush.xpose.msra.mxu0 0.0
    %488 = vmatpush.xpose.msra.mxu0 0.0
    %489 = vmatpush.xpose.msra.mxu0 0.0
    %490 = vmatpush.xpose.msra.mxu0 0.0
    %491 = vmatpush.xpose.msra.mxu0 0.0
    %492 = vmatpush.xpose.msra.mxu0 0.0
    %493 = vmatpush.xpose.msra.mxu0 0.0
    %494 = vmatpush.xpose.msra.mxu0 0.0
    %495 = vmatpush.xpose.msra.mxu0 0.0
    %496 = vmatpush.xpose.msra.mxu0 %v480
    %497 = vmatpush.xpose.msra.mxu0 %v478
    %498 = vmatmul.f32.gmra.mxu0 %v474
    %v499 = vpop.f32.mrf.mxu0
    %v500 = vadd.f32 0.0, %v499
    %501 = vmatmul.f32.gmra.mxu0 %v476
    %v502 = vpop.f32.mrf.mxu0
    %v503 = vadd.f32 0.0, %v502
    %504 = vdwg.mxu0
    %v505 = vmul.f32 %v348, %v500
    %v506 = vmul.f32 %v349, %v503
    %v507 = vmul.f32 %v430, %v305
    %v508 = vmul.f32 %v433, %v306
    %v510 = vsel %vm173, %v505, 0
    %v513 = vsel %vm173, %v506, 0
    %515 = vmatpush.msra.mxu0 0.0
    %516 = vmatpush.msra.mxu0 0.0
    %517 = vmatpush.msra.mxu0 0.0
    %518 = vmatpush.msra.mxu0 0.0
    %519 = vmatpush.msra.mxu0 0.0
    %520 = vmatpush.msra.mxu0 0.0
    %521 = vmatpush.msra.mxu0 0.0
    %522 = vmatpush.msra.mxu0 0.0
    %523 = vmatpush.msra.mxu0 0.0
    %524 = vmatpush.msra.mxu0 0.0
    %525 = vmatpush.msra.mxu0 0.0
    %526 = vmatpush.msra.mxu0 0.0
    %527 = vmatpush.msra.mxu0 0.0
    %528 = vmatpush.msra.mxu0 0.0
    %529 = vmatpush.msra.mxu0 %v508
    %530 = vmatpush.msra.mxu0 %v507
    %531 = vmatmul.f32.gmra.mxu0 %v510
    %v532 = vpop.f32.mrf.mxu0
    %v533 = vadd.f32 0.0, %v532
    %534 = vmatmul.f32.gmra.mxu0 %v513
    %v535 = vpop.f32.mrf.mxu0
    %v536 = vadd.f32 0.0, %v535
    %537 = vdwg.mxu0
    %v538 = vmul.f32 %v459, %v533
    %v539 = vmul.f32 %v462, %v536
    %v540 = vld [vmem:[%s10] sm:$0x1]
    %v542 = vperm.slane %v540, 0
    %v544 = vmul.f32 %v542, %v305
    %v545 = vmul.f32 %v542, %v306
    %v546 = vadd.f32 %v538, %v544
    %v547 = vadd.f32 %v539, %v545
    %v548 = vsub.f32 0.0, %v129
    %v549 = vsub.f32 0.0, %v132
    %v550 = vmul.f32 %v548, 1.442695
    %v551 = vpow.pop %v550
    %v552 = vmul.f32 %v549, 1.442695
    %v553 = vpow.pop %v552
    %v554 = vadd.f32 %v551, 1.0
    %v555 = vadd.f32 %v553, 1.0
    %v556 = vrcp.pop %v554
    %v557 = vmul.f32 %v554, %v556
    %v558 = vsub.f32 1.0, %v557
    %v559 = vmul.f32 %v556, %v558
    %v560 = vadd.f32 %v556, %v559
    %vm561 = vweird.f32 %v554
    %vm562 = vweird.f32 %v556
    %vm563 = vmor %vm561, %vm562
    %v564 = vsel %vm563, %v556, %v560
    %v565 = vand.u32 2147483647, %v554
    %vm566 = vcmp.eq.f32.partialorder %v565, 8.507059e+37
    %v567 = vand.u32 %v554, 2147483648
    %v568 = vor.u32 1.1754944e-38, %v567
    %v569 = vsel %vm566, %v568, %v564
    %v570 = vmul.f32 1.0, %v569
    %v571 = vrcp.pop %v555
    %v572 = vmul.f32 %v555, %v571
    %v573 = vsub.f32 1.0, %v572
    %v574 = vmul.f32 %v571, %v573
    %v575 = vadd.f32 %v571, %v574
    %vm576 = vweird.f32 %v555
    %vm577 = vweird.f32 %v571
    %vm578 = vmor %vm576, %vm577
    %v579 = vsel %vm578, %v571, %v575
    %v580 = vand.u32 2147483647, %v555
    %vm581 = vcmp.eq.f32.partialorder %v580, 8.507059e+37
    %v582 = vand.u32 %v555, 2147483648
    %v583 = vor.u32 1.1754944e-38, %v582
    %v584 = vsel %vm581, %v583, %v579
    %v585 = vmul.f32 1.0, %v584
    %v586 = vmul.f32 %v129, %v570
    %v587 = vmul.f32 %v132, %v585
    %v588 = vmul.f32 %v546, %v586
    %v589 = vmul.f32 %v547, %v587
    %v590 = vmul.f32 %v588, %v588
    %v591 = vmul.f32 %v589, %v589
    %vm592 = vcmask 523264
    %v593 = vsel %vm592, %v590, 0.0
    %594 = vadd.xlane.f32.xlu0 %v593
    %v595 = vpop.xlane.xlu0 %594
    %v596 = vsel %vm592, %v591, 0.0
    %597 = vadd.xlane.f32.xlu0 %v596
    %v598 = vpop.xlane.xlu0 %597
    %v599 = vrcp.pop 64.0
    %v600 = vmul.f32 64.0, %v599
    %v601 = vsub.f32 1.0, %v600
    %v602 = vmul.f32 %v599, %v601
    %v603 = vadd.f32 %v599, %v602
    %vm604 = vweird.f32 %v599
    %v605 = vsel %vm604, %v599, %v603
    %v606 = vmul.f32 %v595, %v605
    %v607 = vmul.f32 %v598, %v605
    %v608 = vadd.f32 %v606, 1e-05
    %v609 = vadd.f32 %v607, 1e-05
    %v610 = vrsqrt.pop %v608
    %v611 = vmul.f32 %v610, %v608
    %v612 = vmul.f32 %v611, %v610
    %v613 = vmul.f32 0.5, %v612
    %v614 = vsub.f32 1.5, %v613
    %v615 = vmul.f32 %v610, %v614
    %vm616 = vweird.f32 %v608
    %vm617 = vweird.f32 %v610
    %vm618 = vmor %vm616, %vm617
    %v619 = vsel %vm618, %v610, %v615
    %v620 = vrsqrt.pop %v609
    %v621 = vmul.f32 %v620, %v609
    %v622 = vmul.f32 %v621, %v620
    %v623 = vmul.f32 0.5, %v622
    %v624 = vsub.f32 1.5, %v623
    %v625 = vmul.f32 %v620, %v624
    %vm626 = vweird.f32 %v609
    %vm627 = vweird.f32 %v620
    %vm628 = vmor %vm626, %vm627
    %v629 = vsel %vm628, %v620, %v625
    %v630 = vmul.f32 %v588, %v619
    %v631 = vmul.f32 %v589, %v629
    %v632 = vld [vmem:[%s13] sm:$0x1]
    %v634 = vperm.slane %v632, 0
    %v636 = vmul.f32 %v630, %v634
    %v637 = vmul.f32 %v631, %v634
    %v638 = vld [vmem:[%s14] sm:$0xff]
    %v639 = vld [vmem:[%s14 + $0x8] sm:$0xff]
    %v640 = vld [vmem:[%s14 + $0x10] sm:$0xff]
    %v641 = vld [vmem:[%s14 + $0x18] sm:$0xff]
    %v642 = vld [vmem:[%s14 + $0x20] sm:$0xff]
    %v643 = vld [vmem:[%s14 + $0x28] sm:$0xff]
    %v644 = vld [vmem:[%s14 + $0x30] sm:$0xff]
    %v645 = vld [vmem:[%s14 + $0x38] sm:$0xff]
    %v647 = vsel %vm592, %v636, 0
    %v650 = vsel %vm592, %v637, 0
    %652 = vmatpush.msra.mxu0 0.0
    %653 = vmatpush.msra.mxu0 0.0
    %654 = vmatpush.msra.mxu0 0.0
    %655 = vmatpush.msra.mxu0 0.0
    %656 = vmatpush.msra.mxu0 0.0
    %657 = vmatpush.msra.mxu0 0.0
    %658 = vmatpush.msra.mxu0 0.0
    %659 = vmatpush.msra.mxu0 0.0
    %660 = vmatpush.msra.mxu0 %v645
    %661 = vmatpush.msra.mxu0 %v644
    %662 = vmatpush.msra.mxu0 %v643
    %663 = vmatpush.msra.mxu0 %v642
    %664 = vmatpush.msra.mxu0 %v641
    %665 = vmatpush.msra.mxu0 %v640
    %666 = vmatpush.msra.mxu0 %v639
    %667 = vmatpush.msra.mxu0 %v638
    %668 = vmatmul.f32.gmra.mxu0 %v647
    %v669 = vpop.f32.mrf.mxu0
    %v670 = vadd.f32 0.0, %v669
    %671 = vmatmul.f32.gmra.mxu0 %v650
    %v672 = vpop.f32.mrf.mxu0
    %v673 = vadd.f32 0.0, %v672
    %674 = vdwg.mxu0
    %v675 = vadd.f32 %v51, %v670
    %v676 = vadd.f32 %v52, %v673
    %677 = vst.msk [vmem:[#allocation2] sm:$0xff] %vm55, %v675
    %678 = vst.msk [vmem:[#allocation2 + $0x8] sm:$0xff] %vm55, %v676
    // Predicated region
    $region62: #{mamba2_block.1} parent=1 // pred_check
      _
    $region63: #{mamba2_block.1} parent=1 // pred_check_branch
      %680 = sbr.rel (0) target = $region65
    $region64: #{mamba2_block.1} parent=1 // pred_region
      %682 = vsyncadd [#allocation3], 0
      %s683 = sshll.u32 [#allocation2], 4
      %s684 = int_to_ptr.vmem [resolvable:$true] %s683
      %s685 = sshll.u32 %s15, 4
      %s686 = int_to_ptr.hbm [resolvable:$true] %s685
      %691 = dma.vmem_to_hbm [thread:$0]  %s684, 256, %s686, [#allocation3], 128, 128, 8
    $region65: #{mamba2_block.1} parent=1 // pred_fallthru
      _
    // Predicated region
    $region66: #{mamba2_block.1} parent=1 // pred_check
      _
    $region67: #{mamba2_block.1} parent=1 // pred_check_branch
      %693 = sbr.rel (0) target = $region69
    $region68: #{mamba2_block.1} parent=1 // pred_region
      %695 = dma.done [#allocation3], 256
    $region69: #{mamba2_block.1} parent=1 // pred_fallthru
      _
    %696 = vsyncpa [#allocation3], 1

</llo_original>
